<compile_context>
chip_gen: v5e
topology: v5e:2x2
jax: 0.10.0
libtpu: 0.0.40
codegen_flags: <defaults>
</compile_context>

<pallas_src>
import jax
import jax.numpy as jnp
from jax.experimental import pallas as pl
from jax.experimental.pallas import tpu as pltpu


# --------------------------------------------------------------------------
# Kernel
# --------------------------------------------------------------------------
def _rope_kernel(x_ref, cos_ref, sin_ref, o_ref):
    # x_ref / o_ref: (TS, D) tile (batch dim squeezed); cos/sin_ref: (TS, D).
    x = x_ref[...].astype(jnp.float32)
    half = x.shape[-1] // 2
    # roll by D//2 swaps the two halves along the lane axis: concat([x2, x1]).
    # The rotate_half sign (-x2) is pre-folded into sin_ref (precompute), so
    # the hot path is 2 vmul + 1 vadd per vreg; the roll runs on the XLU.
    rot = pltpu.roll(x, shift=half, axis=1)
    out = x * cos_ref[...].astype(jnp.float32) + rot * sin_ref[...].astype(jnp.float32)
    o_ref[...] = out.astype(o_ref.dtype)


# --------------------------------------------------------------------------
# One-time cache construction (outside the hot path)
# --------------------------------------------------------------------------
def precompute_rope_cache(d_model, max_seq_length, base=10000.0, dtype=jnp.float32):
    """Build (cos, sin_signed) once: sign-folded sin, already in target dtype.

    sin_signed = concat([-sin_half, +sin_half]) so the kernel can implement
    rotate_half with a pure lane roll.  Mirrors the module's
    _update_cos_sin_cache; computed in f32 then cast.
    """
    inv_freq = 1.0 / (base ** (jnp.arange(0, d_model, 2, dtype=jnp.float32) / d_model))
    seq_idx = jnp.arange(max_seq_length, dtype=jnp.float32)
    freqs = jnp.einsum("i,j->ij", seq_idx, inv_freq)          # (max_seq, d/2)
    cos = jnp.cos(jnp.concatenate([freqs, freqs], axis=-1))   # (max_seq, d)
    sin_half = jnp.sin(freqs)
    sin_signed = jnp.concatenate([-sin_half, sin_half], axis=-1)
    return cos.astype(dtype), sin_signed.astype(dtype)


# --------------------------------------------------------------------------
# VMEM / tiling policy (generation-aware)
# --------------------------------------------------------------------------
def _vmem_budget_bytes():
    """~75% of the chip's physical VMEM (48 MiB v7x, 96 MiB v5e/v6e) — leaves
    headroom for compiler scratch / DMA descriptors."""
    try:
        cap = pltpu.get_tpu_info().vmem_capacity_bytes
    except Exception:
        cap = 64 * 1024 * 1024  # conservative fallback (v7x physical VMEM)
    return int(cap * 0.75)


def _choose_seq_tile(S, D, x_itemsize, cache_itemsize, vmem_budget_bytes,
                     target_tile_bytes=8 * 1024 * 1024):
    """Byte-sized tiling: largest seq tile such that (a) one (ts, D) x tile is
    <= ~8 MiB (DMA time >> 0.35us per-step overhead) and (b) the 8 resident
    double-buffered tiles (x, out, cos, sin) fit the VMEM budget.  Rounded to
    the packed sublane multiple of the narrowest dtype (8 / 16 / 32 rows)."""
    # Resident bytes per seq row: 2 pipeline stages x (x + out + cos + sin).
    resident_bytes_per_row = 2 * D * (2 * x_itemsize + 2 * cache_itemsize)
    sublane = max(8, 32 // max(1, min(x_itemsize, cache_itemsize)))
    max_rows_budget = max(sublane, vmem_budget_bytes // max(1, resident_bytes_per_row))
    max_rows_tile = max(sublane, target_tile_bytes // max(1, D * x_itemsize))
    ts = min(S, max_rows_budget, max_rows_tile)
    if ts < S:
        ts = max(sublane, (ts // sublane) * sublane)
    return ts


# --------------------------------------------------------------------------
# pallas_call wrappers
# --------------------------------------------------------------------------
def _rope_call(x, cos, sin_signed):
    """x: (B, S, D) with D a multiple of 128; cos/sin_signed: (>=S, D)."""
    B, S, D = x.shape
    vmem_budget = _vmem_budget_bytes()
    ts = _choose_seq_tile(S, D, x.dtype.itemsize, cos.dtype.itemsize, vmem_budget)
    if ts >= S:
        ts = S
        if S % 8 != 0 and cos.shape[0] != S:
            # Block must equal the full (first) dim when it isn't a sublane
            # multiple; make the cache's first dim match.
            cos, sin_signed = cos[:S], sin_signed[:S]

    grid = (pl.cdiv(S, ts), B)  # batch innermost -> cos/sin stay resident.

    return pl.pallas_call(
        _rope_kernel,
        out_shape=jax.ShapeDtypeStruct((B, S, D), x.dtype),
        grid_spec=pltpu.PrefetchScalarGridSpec(
            num_scalar_prefetch=0,
            grid=grid,
            in_specs=[
                # x: one (TS, D) slab per (seq-tile, batch) step; batch squeezed.
                pl.BlockSpec((None, ts, D), lambda s, b: (b, s, 0)),
                # cos / signed-sin: indexed straight out of the full cache;
                # same block while b varies -> no refetch across the batch loop.
                pl.BlockSpec((ts, D), lambda s, b: (s, 0)),
                pl.BlockSpec((ts, D), lambda s, b: (s, 0)),
            ],
            out_specs=pl.BlockSpec((None, ts, D), lambda s, b: (b, s, 0)),
        ),
        compiler_params=pltpu.CompilerParams(
            # seq "parallel": a v7x 2-TC split gives each core a disjoint seq
            # range with its own cos/sin tiles fetched once.  batch "arbitrary".
            dimension_semantics=("parallel", "arbitrary"),
            vmem_limit_bytes=vmem_budget,
        ),
    )(x, cos, sin_signed)


def _rope_call_padded(x, cos, sin_signed):
    """Fallback for d_model not a multiple of 128: pad each half up to a lane
    multiple (layout plumbing) so the kernel keeps unmasked stores and a pure
    vreg roll, then strip the padding."""
    B, S, D = x.shape
    half = D // 2
    half_pad = ((half + 127) // 128) * 128
    cos = cos[:S]
    sin_signed = sin_signed[:S]

    def pad_halves(a):
        pad = [(0, 0)] * (a.ndim - 1) + [(0, half_pad - half)]
        return jnp.concatenate(
            [jnp.pad(a[..., :half], pad), jnp.pad(a[..., half:], pad)], axis=-1)

    out_pad = _rope_call(pad_halves(x), pad_halves(cos), pad_halves(sin_signed))
    return jnp.concatenate(
        [out_pad[..., :half], out_pad[..., half_pad:half_pad + half]], axis=-1)


def rotary_positional_embedding(x, cos_cached, sin_signed_cached, base=10000.0):
    """
    Apply RoPE to x of shape [batch, seq, d_model].

    cos_cached / sin_signed_cached come from precompute_rope_cache (rotate_half
    sign already folded into the sin cache, target dtype already baked in), so
    this per-call wrapper does no cache math.

    Equivalent to the PyTorch forward:
        cos = cos_cached[:seq][None]; sin = sin_cached[:seq][None]
        return x * cos + rotate_half(x) * sin
    """
    B, S, D = x.shape
    if D % 2 != 0:
        raise ValueError(f"d_model must be even for RoPE, got {D}")
    if S > cos_cached.shape[0]:
        # Mirrors the module's on-demand _update_cos_sin_cache growth
        # (same base, same cache dtype).
        cos_cached, sin_signed_cached = precompute_rope_cache(
            D, S, base=base, dtype=cos_cached.dtype)

    if D % 128 != 0:
        # TODO(synk): the pad/unpad copies cost extra HBM traffic; a
        # masked-store kernel variant would avoid them for odd d_model.
        return _rope_call_padded(x, cos_cached, sin_signed_cached)
    # Note: for D % 128 == 0 but D % 256 != 0 (e.g. D=128) the roll shift is
    # not a lane multiple; it decomposes on the XLU but that is cheaper than
    # doubling the HBM stream by padding a mem-bound kernel.
    return _rope_call(x, cos_cached, sin_signed_cached)


# --------------------------------------------------------------------------
# Pure-JAX reference (mirrors the PyTorch module exactly)
# --------------------------------------------------------------------------
def rotary_positional_embedding_ref(x, d_model, max_seq_length, base=10000.0):
    inv_freq = 1.0 / (base ** (jnp.arange(0, d_model, 2, dtype=jnp.float32) / d_model))
    seq_idx = jnp.arange(max_seq_length, dtype=jnp.float32)
    freqs = jnp.einsum("i,j->ij", seq_idx, inv_freq)
    emb = jnp.concatenate([freqs, freqs], axis=-1)
    cos_cached, sin_cached = jnp.cos(emb), jnp.sin(emb)
    S = x.shape[1]
    cos = cos_cached[:S][None]
    sin = sin_cached[:S][None]
    half = x.shape[-1] // 2
    x1, x2 = x[..., :half], x[..., half:]
    rot = jnp.concatenate([-x2, x1], axis=-1)
    return x * cos + rot * sin


if __name__ == "__main__":
    key = jax.random.PRNGKey(0)
    k_main, k_pad = jax.random.split(key)

    # Main (lane-dense) path: d_model multiple of 256 so D and D/2 are both
    # lane multiples; seq a multiple of 8 sublanes.
    batch, seq, d_model = 2, 256, 256
    max_seq_length = 512
    x = jax.random.normal(k_main, (batch, seq, d_model), dtype=jnp.float32)
    cos_c, sin_signed_c = precompute_rope_cache(d_model, max_seq_length, dtype=x.dtype)

    out = rotary_positional_embedding(x, cos_c, sin_signed_c)
    out = jax.block_until_ready(out)

    ref = rotary_positional_embedding_ref(x, d_model, max_seq_length)
    assert out.shape == x.shape and out.dtype == x.dtype
    assert jnp.allclose(out, ref, atol=1e-5, rtol=1e-5), "mismatch vs reference"

    # Padded fallback path: d_model not a lane multiple.
    d_small, seq_small = 64, 64
    x2 = jax.random.normal(k_pad, (2, seq_small, d_small), dtype=jnp.float32)
    cos2, sin2 = precompute_rope_cache(d_small, 128, dtype=x2.dtype)
    out2 = jax.block_until_ready(rotary_positional_embedding(x2, cos2, sin2))
    ref2 = rotary_positional_embedding_ref(x2, d_small, 128)
    assert jnp.allclose(out2, ref2, atol=1e-5, rtol=1e-5), "padded-path mismatch"

    print("KERNEL_OK")
</pallas_src>

<mosaic_0001>
module attributes {stable_mosaic.version = 11 : i64} {
  func.func @_rope_kernel(%arg0: i32, %arg1: i32, %arg2: memref<1x256x256xf32, #tpu.memory_space<vmem>>, %arg3: memref<256x256xf32, #tpu.memory_space<vmem>>, %arg4: memref<256x256xf32, #tpu.memory_space<vmem>>, %arg5: memref<1x256x256xf32, #tpu.memory_space<vmem>>) attributes {dimension_semantics = [#tpu.dimension_semantics<parallel>, #tpu.dimension_semantics<arbitrary>], iteration_bounds = array<i64: 1, 2>, scalar_prefetch = 0 : i64, scratch_operands = 0 : i64, tpu.core_type = #tpu.core_type<tc>, window_params = [{transform_indices = @transform_0, window_bounds = array<i64: 1, 256, 256>}, {transform_indices = @transform_1, window_bounds = array<i64: 256, 256>}, {transform_indices = @transform_2, window_bounds = array<i64: 256, 256>}, {transform_indices = @transform_3, window_bounds = array<i64: 1, 256, 256>}]} {
    %c0 = arith.constant 0 : index
    %c0_0 = arith.constant 0 : index
    %c0_1 = arith.constant 0 : index
    %0 = vector.load %arg2[%c0, %c0_0, %c0_1] : memref<1x256x256xf32, #tpu.memory_space<vmem>>, vector<1x256x256xf32>
    %1 = vector.shape_cast %0 : vector<1x256x256xf32> to vector<256x256xf32>
    %c128_i32 = arith.constant 128 : i32
    %2 = tpu.dynamic_rotate %1 by %c128_i32 dim 1 : vector<256x256xf32>, i32 -> vector<256x256xf32>
    %c0_2 = arith.constant 0 : index
    %c0_3 = arith.constant 0 : index
    %3 = vector.load %arg3[%c0_2, %c0_3] : memref<256x256xf32, #tpu.memory_space<vmem>>, vector<256x256xf32>
    %4 = arith.mulf %1, %3 : vector<256x256xf32>
    %c0_4 = arith.constant 0 : index
    %c0_5 = arith.constant 0 : index
    %5 = vector.load %arg4[%c0_4, %c0_5] : memref<256x256xf32, #tpu.memory_space<vmem>>, vector<256x256xf32>
    %6 = arith.mulf %2, %5 : vector<256x256xf32>
    %7 = arith.addf %4, %6 : vector<256x256xf32>
    %c0_6 = arith.constant 0 : index
    %c0_7 = arith.constant 0 : index
    %c0_8 = arith.constant 0 : index
    %8 = vector.load %arg5[%c0_6, %c0_7, %c0_8] : memref<1x256x256xf32, #tpu.memory_space<vmem>>, vector<1x256x256xf32>
    %9 = vector.shape_cast %8 : vector<1x256x256xf32> to vector<256x256xf32>
    %10 = vector.shape_cast %7 : vector<256x256xf32> to vector<1x256x256xf32>
    tpu.vector_store %arg5[%c0_6, %c0_7, %c0_8], %10 {strides = array<i32>} : memref<1x256x256xf32, #tpu.memory_space<vmem>>, vector<1x256x256xf32>,
    return
  }
  func.func @transform_0(%arg0: i32, %arg1: i32) -> (i32, i32, i32) {
    %c0_i32 = arith.constant 0 : i32
    %c0_i32_0 = arith.constant 0 : i32
    return %arg1, %arg0, %c0_i32 : i32, i32, i32
  }
  func.func @transform_1(%arg0: i32, %arg1: i32) -> (i32, i32) {
    %c0_i32 = arith.constant 0 : i32
    %c0_i32_0 = arith.constant 0 : i32
    return %arg0, %c0_i32 : i32, i32
  }
  func.func @transform_2(%arg0: i32, %arg1: i32) -> (i32, i32) {
    %c0_i32 = arith.constant 0 : i32
    %c0_i32_0 = arith.constant 0 : i32
    return %arg0, %c0_i32 : i32, i32
  }
  func.func @transform_3(%arg0: i32, %arg1: i32) -> (i32, i32, i32) {
    %c0_i32 = arith.constant 0 : i32
    %c0_i32_0 = arith.constant 0 : i32
    return %arg1, %arg0, %c0_i32 : i32, i32, i32
  }
}

</mosaic_0001>

<llo_original>
// kernel: tpu_custom_call.1
$region0: #{tpu_custom_call.1}
  #allocation0 [shape = 'u32[]', space=smem, size = 0x4, offset = 0x4, fixed_abs, tag = 'smem constant byte address 0x4 - core index']
  #allocation1 [shape = 'u32[72,128]{1,0:T(1,128)}', space=vmem, size = 0x9000, scoped, tag = 'internal scratch']
  %s0 = inlined_call_operand.hbm [shape: f32[2,256,256], index: 0, kind: input, shape index: {}]
  %s1 = inlined_call_operand.hbm [shape: f32[512,256], index: 1, kind: input, shape index: {}]
  %s2 = inlined_call_operand.hbm [shape: f32[512,256], index: 2, kind: input, shape index: {}]
  %s3 = inlined_call_operand.hbm [shape: f32[2,256,256], index: 3, kind: output, shape index: {}]
  %s4 = sld [smem:[#allocation0]]
  $region57: #{tpu_custom_call.1} parent=0
    _
  %s6 = ssub.s32 1, %s4
  %s7 = scalar_select 0, %s6, %s4
  $region1: #{tpu_custom_call.1} parent=0
    #allocation2 [shape = 'u8[524288]{0}', space=vmem, size = 0x80000, scoped, tag = 'input window, operand 0']
    #allocation3 [shape = 's32[2]{0}', space=sflag, size = 0x8, scoped, tag = 'scoped memory for tpu_custom_call.1']
    #allocation4 [shape = 's32[2]{0}', space=sflag, size = 0x8, scoped, tag = 'scoped memory for tpu_custom_call.1']
    #allocation5 [shape = 'u8[262144]{0}', space=vmem, size = 0x40000, scoped, tag = 'input window, operand 1, single buffered']
    #allocation6 [shape = 's32[1]{0}', space=sflag, size = 0x4, scoped, tag = 'scoped memory for tpu_custom_call.1']
    #allocation7 [shape = 'u8[262144]{0}', space=vmem, size = 0x40000, scoped, tag = 'input window, operand 2, single buffered']
    #allocation8 [shape = 'u8[524288]{0}', space=vmem, size = 0x80000, scoped, tag = 'output window, operand 0']
    %8 = vsyncpa [#allocation3], 0
    %s9 = scalar_lea.sflag [#allocation3], 1
    %10 = vsyncpa %s9, 0
    %11 = vsyncpa [#allocation6], 0
    %12 = vsyncpa [#allocation4], 0
    %s13 = scalar_lea.sflag [#allocation4], 1
    %14 = vsyncpa %s13, 0
    loop: start=0, step=1, limit=4
    $region2: #{tpu_custom_call.1} parent=1 // loop_pre_header
      _
    $region3: #{tpu_custom_call.1} parent=1 // loop_header
      %s16 = sphi 0, %s20
      %p17 = scmp.ge.s32.totalorder %s16, 4
      %s23 = sphi 0, %s35
      %s24 = sphi 0, %s31
      %s25 = sphi 0, %s23
      %s26 = sphi 0, %s24
      %s27 = sphi 0, %s25
      %s28 = sphi 0, %s26
      %s40 = sphi 0, %s42
      %s43 = sphi 0, %s40
      %s44 = sphi 0, %s43
      %s60 = sphi 0, %s44
      %s66 = sphi 0, %s68
      %s69 = sphi 0, %s66
      %s70 = sphi 0, %s69
      %s86 = sphi 0, %s70
      %s92 = sphi 0, %s94
      %s95 = sphi 0, %s92
      %s96 = sphi 0, %s95
      %s112 = sphi 0, %s96
      %s120 = sphi 0, %s122
      %s123 = sphi 0, %s120
      %s124 = sphi 0, %s123
      %s140 = sphi 0, %s124
    $region4: #{tpu_custom_call.1} parent=1 // loop_header_branch
      %19 = sbr.rel (%p17) target = $region8
    $region5: #{tpu_custom_call.1} parent=1 // loop_body
      %s21 = ssub.s32 %s16, 1
      %s22 = ssub.s32 %s16, 2
      %s29 = sadd.s32 1, %s24
      %p30 = scmp.ge.s32.totalorder %s29, 2
      %s31 = scalar_select %p30, 0, %s29
      %s32 = sadd.s32 1, %s23
      %s33 = scalar_select %p30, %s32, %s23
      %p34 = scmp.ge.s32.totalorder %s33, 1
      %s35 = scalar_select %p34, 0, %s33
      %s36 = ssub.s32 %s24, %s31
      %s37 = ssub.s32 %s23, %s35
      %s38 = sor.u32 %s36, %s37
      %p39 = scmp.eq.s32.totalorder %s38, 0
      %s41 = sadd.s32 %s40, 1
      %s42 = scalar_select %p39, %s40, %s41
      %p45 = pneg %p39
      %p46 = scmp.eq.s32.totalorder %s16, 1
      %p47 = por %p45, %p46
      %p48 = scmp.ne.s32.totalorder %s40, %s43
      %p49 = scmp.eq.s32.totalorder %s16, 0
      %p50 = por %p48, %p49
      %p51 = scmp.ne.s32.totalorder %s40, %s43
      %p52 = scmp.eq.s32.totalorder %s21, 1
      %p53 = por %p51, %p52
      %p54 = scmp.ne.s32.totalorder %s43, %s44
      %p55 = scmp.eq.s32.totalorder %s21, 0
      %p56 = por %p54, %p55
      %p57 = scmp.ne.s32.totalorder %s43, %s44
      %p58 = scmp.eq.s32.totalorder %s22, 1
      %p59 = por %p57, %p58
      %p61 = scmp.ne.s32.totalorder %s44, %s60
      %p62 = scmp.eq.s32.totalorder %s22, 0
      %p63 = por %p61, %p62
      %s64 = ssub.s32 %s23, %s35
      %p65 = scmp.eq.s32.totalorder %s64, 0
      %s67 = sadd.s32 %s66, 1
      %s68 = scalar_select %p65, %s66, %s67
      %p71 = pneg %p65
      %p72 = scmp.eq.s32.totalorder %s16, 1
      %p73 = por %p71, %p72
      %p74 = scmp.ne.s32.totalorder %s66, %s69
      %p75 = scmp.eq.s32.totalorder %s16, 0
      %p76 = por %p74, %p75
      %p77 = scmp.ne.s32.totalorder %s66, %s69
      %p78 = scmp.eq.s32.totalorder %s21, 1
      %p79 = por %p77, %p78
      %p80 = scmp.ne.s32.totalorder %s69, %s70
      %p81 = scmp.eq.s32.totalorder %s21, 0
      %p82 = por %p80, %p81
      %p83 = scmp.ne.s32.totalorder %s69, %s70
      %p84 = scmp.eq.s32.totalorder %s22, 1
      %p85 = por %p83, %p84
      %p87 = scmp.ne.s32.totalorder %s70, %s86
      %p88 = scmp.eq.s32.totalorder %s22, 0
      %p89 = por %p87, %p88
      %s90 = ssub.s32 %s23, %s35
      %p91 = scmp.eq.s32.totalorder %s90, 0
      %s93 = sadd.s32 %s92, 1
      %s94 = scalar_select %p91, %s92, %s93
      %p97 = pneg %p91
      %p98 = scmp.eq.s32.totalorder %s16, 1
      %p99 = por %p97, %p98
      %p100 = scmp.ne.s32.totalorder %s92, %s95
      %p101 = scmp.eq.s32.totalorder %s16, 0
      %p102 = por %p100, %p101
      %p103 = scmp.ne.s32.totalorder %s92, %s95
      %p104 = scmp.eq.s32.totalorder %s21, 1
      %p105 = por %p103, %p104
      %p106 = scmp.ne.s32.totalorder %s95, %s96
      %p107 = scmp.eq.s32.totalorder %s21, 0
      %p108 = por %p106, %p107
      %p109 = scmp.ne.s32.totalorder %s95, %s96
      %p110 = scmp.eq.s32.totalorder %s22, 1
      %p111 = por %p109, %p110
      %p113 = scmp.ne.s32.totalorder %s96, %s112
      %p114 = scmp.eq.s32.totalorder %s22, 0
      %p115 = por %p113, %p114
      %s116 = ssub.s32 %s24, %s31
      %s117 = ssub.s32 %s23, %s35
      %s118 = sor.u32 %s116, %s117
      %p119 = scmp.eq.s32.totalorder %s118, 0
      %s121 = sadd.s32 %s120, 1
      %s122 = scalar_select %p119, %s120, %s121
      %p125 = pneg %p119
      %p126 = scmp.eq.s32.totalorder %s16, 1
      %p127 = por %p125, %p126
      %p128 = scmp.ne.s32.totalorder %s120, %s123
      %p129 = scmp.eq.s32.totalorder %s16, 0
      %p130 = por %p128, %p129
      %p131 = scmp.ne.s32.totalorder %s120, %s123
      %p132 = scmp.eq.s32.totalorder %s21, 1
      %p133 = por %p131, %p132
      %p134 = scmp.ne.s32.totalorder %s123, %s124
      %p135 = scmp.eq.s32.totalorder %s21, 0
      %p136 = por %p134, %p135
      %p137 = scmp.ne.s32.totalorder %s123, %s124
      %p138 = scmp.eq.s32.totalorder %s22, 1
      %p139 = por %p137, %p138
      %p141 = scmp.ne.s32.totalorder %s124, %s140
      %p142 = scmp.eq.s32.totalorder %s22, 0
      %p143 = por %p141, %p142
      %p144 = scmp.le.s32.totalorder 1, %s16
      %p145 = scmp.lt.s32.totalorder %s16, 3
      %p146 = pnand %p144, %p145
      %p147 = pneg %p146
      // Predicated region
      $region9: #{tpu_custom_call.1} parent=5 // pred_check
        _
      $region10: #{tpu_custom_call.1} parent=5 // pred_check_branch
        %149 = sbr.rel (%p146) target = $region12
      $region11: #{tpu_custom_call.1} parent=5 // pred_region
        %s150 = ssub.s32 %s16, 1
        // Predicated region
        $region13: #{tpu_custom_call.1} parent=11 // pred_check
          %p151 = pneg %p82
        $region14: #{tpu_custom_call.1} parent=11 // pred_check_branch
          %153 = sbr.rel (%p151) target = $region16
        $region15: #{tpu_custom_call.1} parent=11 // pred_region
          %s154 = smul.u32 32, %s25
          %156 = vsyncadd [#allocation6], 0
          %s157 = smul.addr %s154, 2
          %s158 = smul.addr %s157, 8
          %s159 = scalar_lea.hbm %s1, %s158
          %s160 = sshll.u32 %s159, 4
          %s161 = int_to_ptr.hbm [resolvable:$true] %s160
          %s162 = sshll.u32 [#allocation5], 4
          %s163 = int_to_ptr.vmem [resolvable:$true] %s162
          %168 = dma.hbm_to_vmem [thread:$0]  %s161, 8192, %s163, [#allocation6], 256, 256, 16
        $region16: #{tpu_custom_call.1} parent=11 // pred_fallthru
          _
        // Predicated region
        $region17: #{tpu_custom_call.1} parent=11 // pred_check
          %p169 = pneg %p108
        $region18: #{tpu_custom_call.1} parent=11 // pred_check_branch
          %171 = sbr.rel (%p169) target = $region20
        $region19: #{tpu_custom_call.1} parent=11 // pred_region
          %s172 = smul.u32 32, %s25
          %174 = vsyncadd [#allocation6], 0
          %s175 = smul.addr %s172, 2
          %s176 = smul.addr %s175, 8
          %s177 = scalar_lea.hbm %s2, %s176
          %s178 = sshll.u32 %s177, 4
          %s179 = int_to_ptr.hbm [resolvable:$true] %s178
          %s180 = sshll.u32 [#allocation7], 4
          %s181 = int_to_ptr.vmem [resolvable:$true] %s180
          %186 = dma.hbm_to_vmem [thread:$0]  %s179, 8192, %s181, [#allocation6], 256, 256, 16
        $region20: #{tpu_custom_call.1} parent=11 // pred_fallthru
          _
      $region12: #{tpu_custom_call.1} parent=5 // pred_fallthru
        _
      %p187 = scmp.lt.s32.totalorder %s16, 2
      // Predicated region
      $region21: #{tpu_custom_call.1} parent=5 // pred_check
        %p188 = pneg %p187
      $region22: #{tpu_custom_call.1} parent=5 // pred_check_branch
        %190 = sbr.rel (%p188) target = $region24
      $region23: #{tpu_custom_call.1} parent=5 // pred_region
        // Predicated region
        $region25: #{tpu_custom_call.1} parent=23 // pred_check
          %p191 = pneg %p50
        $region26: #{tpu_custom_call.1} parent=23 // pred_check_branch
          %193 = sbr.rel (%p191) target = $region28
        $region27: #{tpu_custom_call.1} parent=23 // pred_region
          %s194 = sand.u32 %s40, 1
          %s195 = scalar_lea.sflag [#allocation3], %s194
          %s196 = sand.u32 %s40, 1
          %s197 = smul.addr %s196, 512
          %s198 = scalar_lea.vmem [#allocation2], %s197
          %s199 = smul.u32 32, %s23
          %201 = vsyncadd %s195, 0
          %s202 = smul.addr %s199, 2
          %s203 = smul.addr %s24, 64
          %s204 = sadd.s32 %s202, %s203
          %s205 = smul.addr %s204, 8
          %s206 = scalar_lea.hbm %s0, %s205
          %s207 = sshll.u32 %s206, 4
          %s208 = int_to_ptr.hbm [resolvable:$true] %s207
          %s209 = sshll.u32 %s198, 4
          %s210 = int_to_ptr.vmem [resolvable:$true] %s209
          %215 = dma.hbm_to_vmem [thread:$0]  %s208, 8192, %s210, %s195, 256, 256, 16
        $region28: #{tpu_custom_call.1} parent=23 // pred_fallthru
          _
      $region24: #{tpu_custom_call.1} parent=5 // pred_fallthru
        _
      %p216 = scmp.le.s32.totalorder 1, %s16
      %p217 = scmp.lt.s32.totalorder %s16, 3
      %p218 = pnand %p216, %p217
      %p219 = pneg %p218
      // Predicated region
      $region29: #{tpu_custom_call.1} parent=5 // pred_check
        _
      $region30: #{tpu_custom_call.1} parent=5 // pred_check_branch
        %221 = sbr.rel (%p218) target = $region32
      $region31: #{tpu_custom_call.1} parent=5 // pred_region
        %s222 = ssub.s32 %s16, 1
        %s223 = sand.u32 %s43, 1
        %s224 = scalar_lea.sflag [#allocation3], %s223
        %s225 = sand.u32 %s43, 1
        %s226 = smul.addr %s225, 512
        %s227 = scalar_lea.vmem [#allocation2], %s226
        // Predicated region
        $region33: #{tpu_custom_call.1} parent=31 // pred_check
          %p228 = pneg %p56
        $region34: #{tpu_custom_call.1} parent=31 // pred_check_branch
          %230 = sbr.rel (%p228) target = $region36
        $region35: #{tpu_custom_call.1} parent=31 // pred_region
          %232 = dma.done %s224, 8192
        $region36: #{tpu_custom_call.1} parent=31 // pred_fallthru
          _
        // Predicated region
        $region37: #{tpu_custom_call.1} parent=31 // pred_check
          %p233 = pneg %p82
        $region38: #{tpu_custom_call.1} parent=31 // pred_check_branch
          %235 = sbr.rel (%p233) target = $region40
        $region39: #{tpu_custom_call.1} parent=31 // pred_region
          %237 = dma.done [#allocation6], 8192
        $region40: #{tpu_custom_call.1} parent=31 // pred_fallthru
          _
        // Predicated region
        $region41: #{tpu_custom_call.1} parent=31 // pred_check
          %p238 = pneg %p108
        $region42: #{tpu_custom_call.1} parent=31 // pred_check_branch
          %240 = sbr.rel (%p238) target = $region44
        $region43: #{tpu_custom_call.1} parent=31 // pred_region
          %242 = dma.done [#allocation6], 8192
        $region44: #{tpu_custom_call.1} parent=31 // pred_fallthru
          _
        %s243 = sand.u32 %s43, 1
        %s244 = scalar_lea.sflag [#allocation3], %s243
        %s245 = sand.u32 %s43, 1
        %s246 = smul.addr %s245, 512
        %s247 = scalar_lea.vmem [#allocation2], %s246
        %p248 = pneg %p56
        %p249 = pneg %p53
        %p250 = pneg %p82
        %p251 = pneg %p79
        %p252 = pneg %p108
        %p253 = pneg %p105
        %p254 = pneg %p136
        %p255 = pneg %p133
        %s256 = sand.u32 %s123, 1
        %s257 = scalar_lea.sflag [#allocation4], %s256
        %s258 = sand.u32 %s123, 1
        %s259 = smul.addr %s258, 512
        %s260 = scalar_lea.vmem [#allocation8], %s259
        %s261 = smul.u32 32, %s25
        %s262 = smul.u32 32, %s25
        %s263 = smul.u32 32, %s25
        %s264 = smul.u32 32, %s25
        %v265 = vld [vmem:[%s227] sm:$0xff]
        %v266 = vld [vmem:[%s227 + $0x8] sm:$0xff]
        %v267 = vld [vmem:[%s227 + $0x10] sm:$0xff]
        %v268 = vld [vmem:[%s227 + $0x18] sm:$0xff]
        %v269 = vld [vmem:[%s227 + $0x20] sm:$0xff]
        %v270 = vld [vmem:[%s227 + $0x28] sm:$0xff]
        %v271 = vld [vmem:[%s227 + $0x30] sm:$0xff]
        %v272 = vld [vmem:[%s227 + $0x38] sm:$0xff]
        %v273 = vld [vmem:[%s227 + $0x40] sm:$0xff]
        %v274 = vld [vmem:[%s227 + $0x48] sm:$0xff]
        %v275 = vld [vmem:[%s227 + $0x50] sm:$0xff]
        %v276 = vld [vmem:[%s227 + $0x58] sm:$0xff]
        %v277 = vld [vmem:[%s227 + $0x60] sm:$0xff]
        %v278 = vld [vmem:[%s227 + $0x68] sm:$0xff]
        %v279 = vld [vmem:[%s227 + $0x70] sm:$0xff]
        %v280 = vld [vmem:[%s227 + $0x78] sm:$0xff]
        %v281 = vld [vmem:[%s227 + $0x80] sm:$0xff]
        %v282 = vld [vmem:[%s227 + $0x88] sm:$0xff]
        %v283 = vld [vmem:[%s227 + $0x90] sm:$0xff]
        %v284 = vld [vmem:[%s227 + $0x98] sm:$0xff]
        %v285 = vld [vmem:[%s227 + $0xa0] sm:$0xff]
        %v286 = vld [vmem:[%s227 + $0xa8] sm:$0xff]
        %v287 = vld [vmem:[%s227 + $0xb0] sm:$0xff]
        %v288 = vld [vmem:[%s227 + $0xb8] sm:$0xff]
        %v289 = vld [vmem:[%s227 + $0xc0] sm:$0xff]
        %v290 = vld [vmem:[%s227 + $0xc8] sm:$0xff]
        %v291 = vld [vmem:[%s227 + $0xd0] sm:$0xff]
        %v292 = vld [vmem:[%s227 + $0xd8] sm:$0xff]
        %v293 = vld [vmem:[%s227 + $0xe0] sm:$0xff]
        %v294 = vld [vmem:[%s227 + $0xe8] sm:$0xff]
        %v295 = vld [vmem:[%s227 + $0xf0] sm:$0xff]
        %v296 = vld [vmem:[%s227 + $0xf8] sm:$0xff]
        %v297 = vld [vmem:[%s227 + $0x100] sm:$0xff]
        %v298 = vld [vmem:[%s227 + $0x108] sm:$0xff]
        %v299 = vld [vmem:[%s227 + $0x110] sm:$0xff]
        %v300 = vld [vmem:[%s227 + $0x118] sm:$0xff]
        %v301 = vld [vmem:[%s227 + $0x120] sm:$0xff]
        %v302 = vld [vmem:[%s227 + $0x128] sm:$0xff]
        %v303 = vld [vmem:[%s227 + $0x130] sm:$0xff]
        %v304 = vld [vmem:[%s227 + $0x138] sm:$0xff]
        %v305 = vld [vmem:[%s227 + $0x140] sm:$0xff]
        %v306 = vld [vmem:[%s227 + $0x148] sm:$0xff]
        %v307 = vld [vmem:[%s227 + $0x150] sm:$0xff]
        %v308 = vld [vmem:[%s227 + $0x158] sm:$0xff]
        %v309 = vld [vmem:[%s227 + $0x160] sm:$0xff]
        %v310 = vld [vmem:[%s227 + $0x168] sm:$0xff]
        %v311 = vld [vmem:[%s227 + $0x170] sm:$0xff]
        %v312 = vld [vmem:[%s227 + $0x178] sm:$0xff]
        %v313 = vld [vmem:[%s227 + $0x180] sm:$0xff]
        %v314 = vld [vmem:[%s227 + $0x188] sm:$0xff]
        %v315 = vld [vmem:[%s227 + $0x190] sm:$0xff]
        %v316 = vld [vmem:[%s227 + $0x198] sm:$0xff]
        %v317 = vld [vmem:[%s227 + $0x1a0] sm:$0xff]
        %v318 = vld [vmem:[%s227 + $0x1a8] sm:$0xff]
        %v319 = vld [vmem:[%s227 + $0x1b0] sm:$0xff]
        %v320 = vld [vmem:[%s227 + $0x1b8] sm:$0xff]
        %v321 = vld [vmem:[%s227 + $0x1c0] sm:$0xff]
        %v322 = vld [vmem:[%s227 + $0x1c8] sm:$0xff]
        %v323 = vld [vmem:[%s227 + $0x1d0] sm:$0xff]
        %v324 = vld [vmem:[%s227 + $0x1d8] sm:$0xff]
        %v325 = vld [vmem:[%s227 + $0x1e0] sm:$0xff]
        %v326 = vld [vmem:[%s227 + $0x1e8] sm:$0xff]
        %v327 = vld [vmem:[%s227 + $0x1f0] sm:$0xff]
        %v328 = vld [vmem:[%s227 + $0x1f8] sm:$0xff]
        %v329 = vld [vmem:[#allocation5] sm:$0xff]
        %v330 = vld [vmem:[#allocation5 + $0x8] sm:$0xff]
        %v331 = vld [vmem:[#allocation5 + $0x10] sm:$0xff]
        %v332 = vld [vmem:[#allocation5 + $0x18] sm:$0xff]
        %v333 = vld [vmem:[#allocation5 + $0x20] sm:$0xff]
        %v334 = vld [vmem:[#allocation5 + $0x28] sm:$0xff]
        %v335 = vld [vmem:[#allocation5 + $0x30] sm:$0xff]
        %v336 = vld [vmem:[#allocation5 + $0x38] sm:$0xff]
        %v337 = vld [vmem:[#allocation5 + $0x40] sm:$0xff]
        %v338 = vld [vmem:[#allocation5 + $0x48] sm:$0xff]
        %v339 = vld [vmem:[#allocation5 + $0x50] sm:$0xff]
        %v340 = vld [vmem:[#allocation5 + $0x58] sm:$0xff]
        %v341 = vld [vmem:[#allocation5 + $0x60] sm:$0xff]
        %v342 = vld [vmem:[#allocation5 + $0x68] sm:$0xff]
        %v343 = vld [vmem:[#allocation5 + $0x70] sm:$0xff]
        %v344 = vld [vmem:[#allocation5 + $0x78] sm:$0xff]
        %v345 = vld [vmem:[#allocation5 + $0x80] sm:$0xff]
        %v346 = vld [vmem:[#allocation5 + $0x88] sm:$0xff]
        %v347 = vld [vmem:[#allocation5 + $0x90] sm:$0xff]
        %v348 = vld [vmem:[#allocation5 + $0x98] sm:$0xff]
        %v349 = vld [vmem:[#allocation5 + $0xa0] sm:$0xff]
        %v350 = vld [vmem:[#allocation5 + $0xa8] sm:$0xff]
        %v351 = vld [vmem:[#allocation5 + $0xb0] sm:$0xff]
        %v352 = vld [vmem:[#allocation5 + $0xb8] sm:$0xff]
        %v353 = vld [vmem:[#allocation5 + $0xc0] sm:$0xff]
        %v354 = vld [vmem:[#allocation5 + $0xc8] sm:$0xff]
        %v355 = vld [vmem:[#allocation5 + $0xd0] sm:$0xff]
        %v356 = vld [vmem:[#allocation5 + $0xd8] sm:$0xff]
        %v357 = vld [vmem:[#allocation5 + $0xe0] sm:$0xff]
        %v358 = vld [vmem:[#allocation5 + $0xe8] sm:$0xff]
        %v359 = vld [vmem:[#allocation5 + $0xf0] sm:$0xff]
        %v360 = vld [vmem:[#allocation5 + $0xf8] sm:$0xff]
        %v361 = vld [vmem:[#allocation5 + $0x100] sm:$0xff]
        %v362 = vld [vmem:[#allocation5 + $0x108] sm:$0xff]
        %v363 = vld [vmem:[#allocation5 + $0x110] sm:$0xff]
        %v364 = vld [vmem:[#allocation5 + $0x118] sm:$0xff]
        %v365 = vld [vmem:[#allocation5 + $0x120] sm:$0xff]
        %v366 = vld [vmem:[#allocation5 + $0x128] sm:$0xff]
        %v367 = vld [vmem:[#allocation5 + $0x130] sm:$0xff]
        %v368 = vld [vmem:[#allocation5 + $0x138] sm:$0xff]
        %v369 = vld [vmem:[#allocation5 + $0x140] sm:$0xff]
        %v370 = vld [vmem:[#allocation5 + $0x148] sm:$0xff]
        %v371 = vld [vmem:[#allocation5 + $0x150] sm:$0xff]
        %v372 = vld [vmem:[#allocation5 + $0x158] sm:$0xff]
        %v373 = vld [vmem:[#allocation5 + $0x160] sm:$0xff]
        %v374 = vld [vmem:[#allocation5 + $0x168] sm:$0xff]
        %v375 = vld [vmem:[#allocation5 + $0x170] sm:$0xff]
        %v376 = vld [vmem:[#allocation5 + $0x178] sm:$0xff]
        %v377 = vld [vmem:[#allocation5 + $0x180] sm:$0xff]
        %v378 = vld [vmem:[#allocation5 + $0x188] sm:$0xff]
        %v379 = vld [vmem:[#allocation5 + $0x190] sm:$0xff]
        %v380 = vld [vmem:[#allocation5 + $0x198] sm:$0xff]
        %v381 = vld [vmem:[#allocation5 + $0x1a0] sm:$0xff]
        %v382 = vld [vmem:[#allocation5 + $0x1a8] sm:$0xff]
        %v383 = vld [vmem:[#allocation5 + $0x1b0] sm:$0xff]
        %v384 = vld [vmem:[#allocation5 + $0x1b8] sm:$0xff]
        %v385 = vld [vmem:[#allocation5 + $0x1c0] sm:$0xff]
        %v386 = vld [vmem:[#allocation5 + $0x1c8] sm:$0xff]
        %v387 = vld [vmem:[#allocation5 + $0x1d0] sm:$0xff]
        %v388 = vld [vmem:[#allocation5 + $0x1d8] sm:$0xff]
        %v389 = vld [vmem:[#allocation5 + $0x1e0] sm:$0xff]
        %v390 = vld [vmem:[#allocation5 + $0x1e8] sm:$0xff]
        %v391 = vld [vmem:[#allocation5 + $0x1f0] sm:$0xff]
        %v392 = vld [vmem:[#allocation5 + $0x1f8] sm:$0xff]
        %v393 = vmul.f32 %v265, %v329
        %v394 = vmul.f32 %v266, %v330
        %v395 = vmul.f32 %v267, %v331
        %v396 = vmul.f32 %v268, %v332
        %v397 = vmul.f32 %v269, %v333
        %v398 = vmul.f32 %v270, %v334
        %v399 = vmul.f32 %v271, %v335
        %v400 = vmul.f32 %v272, %v336
        %v401 = vmul.f32 %v273, %v337
        %v402 = vmul.f32 %v274, %v338
        %v403 = vmul.f32 %v275, %v339
        %v404 = vmul.f32 %v276, %v340
        %v405 = vmul.f32 %v277, %v341
        %v406 = vmul.f32 %v278, %v342
        %v407 = vmul.f32 %v279, %v343
        %v408 = vmul.f32 %v280, %v344
        %v409 = vmul.f32 %v281, %v345
        %v410 = vmul.f32 %v282, %v346
        %v411 = vmul.f32 %v283, %v347
        %v412 = vmul.f32 %v284, %v348
        %v413 = vmul.f32 %v285, %v349
        %v414 = vmul.f32 %v286, %v350
        %v415 = vmul.f32 %v287, %v351
        %v416 = vmul.f32 %v288, %v352
        %v417 = vmul.f32 %v289, %v353
        %v418 = vmul.f32 %v290, %v354
        %v419 = vmul.f32 %v291, %v355
        %v420 = vmul.f32 %v292, %v356
        %v421 = vmul.f32 %v293, %v357
        %v422 = vmul.f32 %v294, %v358
        %v423 = vmul.f32 %v295, %v359
        %v424 = vmul.f32 %v296, %v360
        %v425 = vmul.f32 %v297, %v361
        %v426 = vmul.f32 %v298, %v362
        %v427 = vmul.f32 %v299, %v363
        %v428 = vmul.f32 %v300, %v364
        %v429 = vmul.f32 %v301, %v365
        %v430 = vmul.f32 %v302, %v366
        %v431 = vmul.f32 %v303, %v367
        %v432 = vmul.f32 %v304, %v368
        %v433 = vmul.f32 %v305, %v369
        %v434 = vmul.f32 %v306, %v370
        %v435 = vmul.f32 %v307, %v371
        %v436 = vmul.f32 %v308, %v372
        %v437 = vmul.f32 %v309, %v373
        %v438 = vmul.f32 %v310, %v374
        %v439 = vmul.f32 %v311, %v375
        %v440 = vmul.f32 %v312, %v376
        %v441 = vmul.f32 %v313, %v377
        %v442 = vmul.f32 %v314, %v378
        %v443 = vmul.f32 %v315, %v379
        %v444 = vmul.f32 %v316, %v380
        %v445 = vmul.f32 %v317, %v381
        %v446 = vmul.f32 %v318, %v382
        %v447 = vmul.f32 %v319, %v383
        %v448 = vmul.f32 %v320, %v384
        %v449 = vmul.f32 %v321, %v385
        %v450 = vmul.f32 %v322, %v386
        %v451 = vmul.f32 %v323, %v387
        %v452 = vmul.f32 %v324, %v388
        %v453 = vmul.f32 %v325, %v389
        %v454 = vmul.f32 %v326, %v390
        %v455 = vmul.f32 %v327, %v391
        %v456 = vmul.f32 %v328, %v392
        %v457 = vld [vmem:[#allocation7] sm:$0xff]
        %v458 = vld [vmem:[#allocation7 + $0x8] sm:$0xff]
        %v459 = vld [vmem:[#allocation7 + $0x10] sm:$0xff]
        %v460 = vld [vmem:[#allocation7 + $0x18] sm:$0xff]
        %v461 = vld [vmem:[#allocation7 + $0x20] sm:$0xff]
        %v462 = vld [vmem:[#allocation7 + $0x28] sm:$0xff]
        %v463 = vld [vmem:[#allocation7 + $0x30] sm:$0xff]
        %v464 = vld [vmem:[#allocation7 + $0x38] sm:$0xff]
        %v465 = vld [vmem:[#allocation7 + $0x40] sm:$0xff]
        %v466 = vld [vmem:[#allocation7 + $0x48] sm:$0xff]
        %v467 = vld [vmem:[#allocation7 + $0x50] sm:$0xff]
        %v468 = vld [vmem:[#allocation7 + $0x58] sm:$0xff]
        %v469 = vld [vmem:[#allocation7 + $0x60] sm:$0xff]
        %v470 = vld [vmem:[#allocation7 + $0x68] sm:$0xff]
        %v471 = vld [vmem:[#allocation7 + $0x70] sm:$0xff]
        %v472 = vld [vmem:[#allocation7 + $0x78] sm:$0xff]
        %v473 = vld [vmem:[#allocation7 + $0x80] sm:$0xff]
        %v474 = vld [vmem:[#allocation7 + $0x88] sm:$0xff]
        %v475 = vld [vmem:[#allocation7 + $0x90] sm:$0xff]
        %v476 = vld [vmem:[#allocation7 + $0x98] sm:$0xff]
        %v477 = vld [vmem:[#allocation7 + $0xa0] sm:$0xff]
        %v478 = vld [vmem:[#allocation7 + $0xa8] sm:$0xff]
        %v479 = vld [vmem:[#allocation7 + $0xb0] sm:$0xff]
        %v480 = vld [vmem:[#allocation7 + $0xb8] sm:$0xff]
        %v481 = vld [vmem:[#allocation7 + $0xc0] sm:$0xff]
        %v482 = vld [vmem:[#allocation7 + $0xc8] sm:$0xff]
        %v483 = vld [vmem:[#allocation7 + $0xd0] sm:$0xff]
        %v484 = vld [vmem:[#allocation7 + $0xd8] sm:$0xff]
        %v485 = vld [vmem:[#allocation7 + $0xe0] sm:$0xff]
        %v486 = vld [vmem:[#allocation7 + $0xe8] sm:$0xff]
        %v487 = vld [vmem:[#allocation7 + $0xf0] sm:$0xff]
        %v488 = vld [vmem:[#allocation7 + $0xf8] sm:$0xff]
        %v489 = vld [vmem:[#allocation7 + $0x100] sm:$0xff]
        %v490 = vld [vmem:[#allocation7 + $0x108] sm:$0xff]
        %v491 = vld [vmem:[#allocation7 + $0x110] sm:$0xff]
        %v492 = vld [vmem:[#allocation7 + $0x118] sm:$0xff]
        %v493 = vld [vmem:[#allocation7 + $0x120] sm:$0xff]
        %v494 = vld [vmem:[#allocation7 + $0x128] sm:$0xff]
        %v495 = vld [vmem:[#allocation7 + $0x130] sm:$0xff]
        %v496 = vld [vmem:[#allocation7 + $0x138] sm:$0xff]
        %v497 = vld [vmem:[#allocation7 + $0x140] sm:$0xff]
        %v498 = vld [vmem:[#allocation7 + $0x148] sm:$0xff]
        %v499 = vld [vmem:[#allocation7 + $0x150] sm:$0xff]
        %v500 = vld [vmem:[#allocation7 + $0x158] sm:$0xff]
        %v501 = vld [vmem:[#allocation7 + $0x160] sm:$0xff]
        %v502 = vld [vmem:[#allocation7 + $0x168] sm:$0xff]
        %v503 = vld [vmem:[#allocation7 + $0x170] sm:$0xff]
        %v504 = vld [vmem:[#allocation7 + $0x178] sm:$0xff]
        %v505 = vld [vmem:[#allocation7 + $0x180] sm:$0xff]
        %v506 = vld [vmem:[#allocation7 + $0x188] sm:$0xff]
        %v507 = vld [vmem:[#allocation7 + $0x190] sm:$0xff]
        %v508 = vld [vmem:[#allocation7 + $0x198] sm:$0xff]
        %v509 = vld [vmem:[#allocation7 + $0x1a0] sm:$0xff]
        %v510 = vld [vmem:[#allocation7 + $0x1a8] sm:$0xff]
        %v511 = vld [vmem:[#allocation7 + $0x1b0] sm:$0xff]
        %v512 = vld [vmem:[#allocation7 + $0x1b8] sm:$0xff]
        %v513 = vld [vmem:[#allocation7 + $0x1c0] sm:$0xff]
        %v514 = vld [vmem:[#allocation7 + $0x1c8] sm:$0xff]
        %v515 = vld [vmem:[#allocation7 + $0x1d0] sm:$0xff]
        %v516 = vld [vmem:[#allocation7 + $0x1d8] sm:$0xff]
        %v517 = vld [vmem:[#allocation7 + $0x1e0] sm:$0xff]
        %v518 = vld [vmem:[#allocation7 + $0x1e8] sm:$0xff]
        %v519 = vld [vmem:[#allocation7 + $0x1f0] sm:$0xff]
        %v520 = vld [vmem:[#allocation7 + $0x1f8] sm:$0xff]
        %v521 = vmul.f32 %v266, %v457
        %v522 = vmul.f32 %v265, %v458
        %v523 = vmul.f32 %v268, %v459
        %v524 = vmul.f32 %v267, %v460
        %v525 = vmul.f32 %v270, %v461
        %v526 = vmul.f32 %v269, %v462
        %v527 = vmul.f32 %v272, %v463
        %v528 = vmul.f32 %v271, %v464
        %v529 = vmul.f32 %v274, %v465
        %v530 = vmul.f32 %v273, %v466
        %v531 = vmul.f32 %v276, %v467
        %v532 = vmul.f32 %v275, %v468
        %v533 = vmul.f32 %v278, %v469
        %v534 = vmul.f32 %v277, %v470
        %v535 = vmul.f32 %v280, %v471
        %v536 = vmul.f32 %v279, %v472
        %v537 = vmul.f32 %v282, %v473
        %v538 = vmul.f32 %v281, %v474
        %v539 = vmul.f32 %v284, %v475
        %v540 = vmul.f32 %v283, %v476
        %v541 = vmul.f32 %v286, %v477
        %v542 = vmul.f32 %v285, %v478
        %v543 = vmul.f32 %v288, %v479
        %v544 = vmul.f32 %v287, %v480
        %v545 = vmul.f32 %v290, %v481
        %v546 = vmul.f32 %v289, %v482
        %v547 = vmul.f32 %v292, %v483
        %v548 = vmul.f32 %v291, %v484
        %v549 = vmul.f32 %v294, %v485
        %v550 = vmul.f32 %v293, %v486
        %v551 = vmul.f32 %v296, %v487
        %v552 = vmul.f32 %v295, %v488
        %v553 = vmul.f32 %v298, %v489
        %v554 = vmul.f32 %v297, %v490
        %v555 = vmul.f32 %v300, %v491
        %v556 = vmul.f32 %v299, %v492
        %v557 = vmul.f32 %v302, %v493
        %v558 = vmul.f32 %v301, %v494
        %v559 = vmul.f32 %v304, %v495
        %v560 = vmul.f32 %v303, %v496
        %v561 = vmul.f32 %v306, %v497
        %v562 = vmul.f32 %v305, %v498
        %v563 = vmul.f32 %v308, %v499
        %v564 = vmul.f32 %v307, %v500
        %v565 = vmul.f32 %v310, %v501
        %v566 = vmul.f32 %v309, %v502
        %v567 = vmul.f32 %v312, %v503
        %v568 = vmul.f32 %v311, %v504
        %v569 = vmul.f32 %v314, %v505
        %v570 = vmul.f32 %v313, %v506
        %v571 = vmul.f32 %v316, %v507
        %v572 = vmul.f32 %v315, %v508
        %v573 = vmul.f32 %v318, %v509
        %v574 = vmul.f32 %v317, %v510
        %v575 = vmul.f32 %v320, %v511
        %v576 = vmul.f32 %v319, %v512
        %v577 = vmul.f32 %v322, %v513
        %v578 = vmul.f32 %v321, %v514
        %v579 = vmul.f32 %v324, %v515
        %v580 = vmul.f32 %v323, %v516
        %v581 = vmul.f32 %v326, %v517
        %v582 = vmul.f32 %v325, %v518
        %v583 = vmul.f32 %v328, %v519
        %v584 = vmul.f32 %v327, %v520
        %v585 = vadd.f32 %v393, %v521
        %v586 = vadd.f32 %v394, %v522
        %v587 = vadd.f32 %v395, %v523
        %v588 = vadd.f32 %v396, %v524
        %v589 = vadd.f32 %v397, %v525
        %v590 = vadd.f32 %v398, %v526
        %v591 = vadd.f32 %v399, %v527
        %v592 = vadd.f32 %v400, %v528
        %v593 = vadd.f32 %v401, %v529
        %v594 = vadd.f32 %v402, %v530
        %v595 = vadd.f32 %v403, %v531
        %v596 = vadd.f32 %v404, %v532
        %v597 = vadd.f32 %v405, %v533
        %v598 = vadd.f32 %v406, %v534
        %v599 = vadd.f32 %v407, %v535
        %v600 = vadd.f32 %v408, %v536
        %v601 = vadd.f32 %v409, %v537
        %v602 = vadd.f32 %v410, %v538
        %v603 = vadd.f32 %v411, %v539
        %v604 = vadd.f32 %v412, %v540
        %v605 = vadd.f32 %v413, %v541
        %v606 = vadd.f32 %v414, %v542
        %v607 = vadd.f32 %v415, %v543
        %v608 = vadd.f32 %v416, %v544
        %v609 = vadd.f32 %v417, %v545
        %v610 = vadd.f32 %v418, %v546
        %v611 = vadd.f32 %v419, %v547
        %v612 = vadd.f32 %v420, %v548
        %v613 = vadd.f32 %v421, %v549
        %v614 = vadd.f32 %v422, %v550
        %v615 = vadd.f32 %v423, %v551
        %v616 = vadd.f32 %v424, %v552
        %v617 = vadd.f32 %v425, %v553
        %v618 = vadd.f32 %v426, %v554
        %v619 = vadd.f32 %v427, %v555
        %v620 = vadd.f32 %v428, %v556
        %v621 = vadd.f32 %v429, %v557
        %v622 = vadd.f32 %v430, %v558
        %v623 = vadd.f32 %v431, %v559
        %v624 = vadd.f32 %v432, %v560
        %v625 = vadd.f32 %v433, %v561
        %v626 = vadd.f32 %v434, %v562
        %v627 = vadd.f32 %v435, %v563
        %v628 = vadd.f32 %v436, %v564
        %v629 = vadd.f32 %v437, %v565
        %v630 = vadd.f32 %v438, %v566
        %v631 = vadd.f32 %v439, %v567
        %v632 = vadd.f32 %v440, %v568
        %v633 = vadd.f32 %v441, %v569
        %v634 = vadd.f32 %v442, %v570
        %v635 = vadd.f32 %v443, %v571
        %v636 = vadd.f32 %v444, %v572
        %v637 = vadd.f32 %v445, %v573
        %v638 = vadd.f32 %v446, %v574
        %v639 = vadd.f32 %v447, %v575
        %v640 = vadd.f32 %v448, %v576
        %v641 = vadd.f32 %v449, %v577
        %v642 = vadd.f32 %v450, %v578
        %v643 = vadd.f32 %v451, %v579
        %v644 = vadd.f32 %v452, %v580
        %v645 = vadd.f32 %v453, %v581
        %v646 = vadd.f32 %v454, %v582
        %v647 = vadd.f32 %v455, %v583
        %v648 = vadd.f32 %v456, %v584
        %649 = vst [vmem:[%s260] sm:$0xff] %v585
        %650 = vst [vmem:[%s260 + $0x8] sm:$0xff] %v586
        %651 = vst [vmem:[%s260 + $0x10] sm:$0xff] %v587
        %652 = vst [vmem:[%s260 + $0x18] sm:$0xff] %v588
        %653 = vst [vmem:[%s260 + $0x20] sm:$0xff] %v589
        %654 = vst [vmem:[%s260 + $0x28] sm:$0xff] %v590
        %655 = vst [vmem:[%s260 + $0x30] sm:$0xff] %v591
        %656 = vst [vmem:[%s260 + $0x38] sm:$0xff] %v592
        %657 = vst [vmem:[%s260 + $0x40] sm:$0xff] %v593
        %658 = vst [vmem:[%s260 + $0x48] sm:$0xff] %v594
        %659 = vst [vmem:[%s260 + $0x50] sm:$0xff] %v595
        %660 = vst [vmem:[%s260 + $0x58] sm:$0xff] %v596
        %661 = vst [vmem:[%s260 + $0x60] sm:$0xff] %v597
        %662 = vst [vmem:[%s260 + $0x68] sm:$0xff] %v598
        %663 = vst [vmem:[%s260 + $0x70] sm:$0xff] %v599
        %664 = vst [vmem:[%s260 + $0x78] sm:$0xff] %v600
        %665 = vst [vmem:[%s260 + $0x80] sm:$0xff] %v601
        %666 = vst [vmem:[%s260 + $0x88] sm:$0xff] %v602
        %667 = vst [vmem:[%s260 + $0x90] sm:$0xff] %v603
        %668 = vst [vmem:[%s260 + $0x98] sm:$0xff] %v604
        %669 = vst [vmem:[%s260 + $0xa0] sm:$0xff] %v605
        %670 = vst [vmem:[%s260 + $0xa8] sm:$0xff] %v606
        %671 = vst [vmem:[%s260 + $0xb0] sm:$0xff] %v607
        %672 = vst [vmem:[%s260 + $0xb8] sm:$0xff] %v608
        %673 = vst [vmem:[%s260 + $0xc0] sm:$0xff] %v609
        %674 = vst [vmem:[%s260 + $0xc8] sm:$0xff] %v610
        %675 = vst [vmem:[%s260 + $0xd0] sm:$0xff] %v611
        %676 = vst [vmem:[%s260 + $0xd8] sm:$0xff] %v612
        %677 = vst [vmem:[%s260 + $0xe0] sm:$0xff] %v613
        %678 = vst [vmem:[%s260 + $0xe8] sm:$0xff] %v614
        %679 = vst [vmem:[%s260 + $0xf0] sm:$0xff] %v615
        %680 = vst [vmem:[%s260 + $0xf8] sm:$0xff] %v616
        %681 = vst [vmem:[%s260 + $0x100] sm:$0xff] %v617
        %682 = vst [vmem:[%s260 + $0x108] sm:$0xff] %v618
        %683 = vst [vmem:[%s260 + $0x110] sm:$0xff] %v619
        %684 = vst [vmem:[%s260 + $0x118] sm:$0xff] %v620
        %685 = vst [vmem:[%s260 + $0x120] sm:$0xff] %v621
        %686 = vst [vmem:[%s260 + $0x128] sm:$0xff] %v622
        %687 = vst [vmem:[%s260 + $0x130] sm:$0xff] %v623
        %688 = vst [vmem:[%s260 + $0x138] sm:$0xff] %v624
        %689 = vst [vmem:[%s260 + $0x140] sm:$0xff] %v625
        %690 = vst [vmem:[%s260 + $0x148] sm:$0xff] %v626
        %691 = vst [vmem:[%s260 + $0x150] sm:$0xff] %v627
        %692 = vst [vmem:[%s260 + $0x158] sm:$0xff] %v628
        %693 = vst [vmem:[%s260 + $0x160] sm:$0xff] %v629
        %694 = vst [vmem:[%s260 + $0x168] sm:$0xff] %v630
        %695 = vst [vmem:[%s260 + $0x170] sm:$0xff] %v631
        %696 = vst [vmem:[%s260 + $0x178] sm:$0xff] %v632
        %697 = vst [vmem:[%s260 + $0x180] sm:$0xff] %v633
        %698 = vst [vmem:[%s260 + $0x188] sm:$0xff] %v634
        %699 = vst [vmem:[%s260 + $0x190] sm:$0xff] %v635
        %700 = vst [vmem:[%s260 + $0x198] sm:$0xff] %v636
        %701 = vst [vmem:[%s260 + $0x1a0] sm:$0xff] %v637
        %702 = vst [vmem:[%s260 + $0x1a8] sm:$0xff] %v638
        %703 = vst [vmem:[%s260 + $0x1b0] sm:$0xff] %v639
        %704 = vst [vmem:[%s260 + $0x1b8] sm:$0xff] %v640
        %705 = vst [vmem:[%s260 + $0x1c0] sm:$0xff] %v641
        %706 = vst [vmem:[%s260 + $0x1c8] sm:$0xff] %v642
        %707 = vst [vmem:[%s260 + $0x1d0] sm:$0xff] %v643
        %708 = vst [vmem:[%s260 + $0x1d8] sm:$0xff] %v644
        %709 = vst [vmem:[%s260 + $0x1e0] sm:$0xff] %v645
        %710 = vst [vmem:[%s260 + $0x1e8] sm:$0xff] %v646
        %711 = vst [vmem:[%s260 + $0x1f0] sm:$0xff] %v647
        %712 = vst [vmem:[%s260 + $0x1f8] sm:$0xff] %v648
        %s713 = sand.u32 %s123, 1
        %s714 = scalar_lea.sflag [#allocation4], %s713
        %s715 = sand.u32 %s123, 1
        %s716 = smul.addr %s715, 512
        %s717 = scalar_lea.vmem [#allocation8], %s716
        // Predicated region
        $region45: #{tpu_custom_call.1} parent=31 // pred_check
          %p718 = pneg %p133
        $region46: #{tpu_custom_call.1} parent=31 // pred_check_branch
          %720 = sbr.rel (%p718) target = $region48
        $region47: #{tpu_custom_call.1} parent=31 // pred_region
          %s721 = smul.u32 32, %s25
          %723 = vsyncadd %s714, 0
          %s724 = smul.addr %s721, 2
          %s725 = smul.addr %s26, 64
          %s726 = sadd.s32 %s724, %s725
          %s727 = smul.addr %s726, 8
          %s728 = scalar_lea.hbm %s3, %s727
          %s729 = sshll.u32 %s717, 4
          %s730 = int_to_ptr.vmem [resolvable:$true] %s729
          %s731 = sshll.u32 %s728, 4
          %s732 = int_to_ptr.hbm [resolvable:$true] %s731
          %737 = dma.vmem_to_hbm [thread:$0]  %s730, 8192, %s732, %s714, 256, 256, 16
        $region48: #{tpu_custom_call.1} parent=31 // pred_fallthru
          _
      $region32: #{tpu_custom_call.1} parent=5 // pred_fallthru
        _
      %p738 = scmp.le.s32.totalorder 2, %s16
      // Predicated region
      $region49: #{tpu_custom_call.1} parent=5 // pred_check
        %p739 = pneg %p738
      $region50: #{tpu_custom_call.1} parent=5 // pred_check_branch
        %741 = sbr.rel (%p739) target = $region52
      $region51: #{tpu_custom_call.1} parent=5 // pred_region
        %s742 = ssub.s32 %s16, 2
        // Predicated region
        $region53: #{tpu_custom_call.1} parent=51 // pred_check
          %p743 = pneg %p139
        $region54: #{tpu_custom_call.1} parent=51 // pred_check_branch
          %745 = sbr.rel (%p743) target = $region56
        $region55: #{tpu_custom_call.1} parent=51 // pred_region
          %s746 = sand.u32 %s124, 1
          %s747 = scalar_lea.sflag [#allocation4], %s746
          %s748 = sand.u32 %s124, 1
          %s749 = smul.addr %s748, 512
          %s750 = scalar_lea.vmem [#allocation8], %s749
          %752 = dma.done %s747, 8192
        $region56: #{tpu_custom_call.1} parent=51 // pred_fallthru
          _
      $region52: #{tpu_custom_call.1} parent=5 // pred_fallthru
        _
    $region6: #{tpu_custom_call.1} parent=1 // loop_footer
      %s20 = sadd.s32 1, %s16
    $region7: #{tpu_custom_call.1} parent=1 // loop_footer_branch
      %15 = sbr.rel target = $region3
    $region8: #{tpu_custom_call.1} parent=1 // loop_exit
      _
    %753 = vsyncpa [#allocation3], 1
    %s754 = scalar_lea.sflag [#allocation3], 1
    %755 = vsyncpa %s754, 1
    %756 = vsyncpa [#allocation6], 1
    %757 = vsyncpa [#allocation4], 1
    %s758 = scalar_lea.sflag [#allocation4], 1
    %759 = vsyncpa %s758, 1

</llo_original>
